<compile_context>
chip_gen: v5e
topology: v5e:2x2
jax: 0.10.0
libtpu: 0.0.40
codegen_flags: <defaults>
</compile_context>

<pallas_src>
import jax
import jax.numpy as jnp
from jax.experimental import pallas as pl
from jax.experimental.pallas import tpu as pltpu

_LANES = 128
_SUB = 8            # f32 sublane granularity
_ROW_ALIGN = 32     # strictest (int8) sublane packing -> rows always multiple of 32
_TR_MAX = 2048      # rows per grid step (1 MiB f32 + 256 KiB int8 per block)
_CORE_SPLITS = 2    # leading "parallel" axis -> dual-TC sharding on v7x


def _make_kernel(n, tr, inner_steps):
    blk_elems = tr * _LANES
    sh3 = (tr // _SUB, _SUB, _LANES)

    def kernel(x_ref, t_ref, pcnt_ref, ncnt_ref, bpos_ref, ball_ref):
        c = pl.program_id(0)
        i = pl.program_id(1)

        @pl.when(i == 0)
        def _init():
            pcnt_ref[...] = jnp.zeros_like(pcnt_ref)
            ncnt_ref[...] = jnp.zeros_like(ncnt_ref)
            bpos_ref[...] = jnp.zeros_like(bpos_ref)
            ball_ref[...] = jnp.zeros_like(ball_ref)

        x = x_ref[...].astype(jnp.float32)
        ti = t_ref[...].astype(jnp.int32)           # targets.long()
        tf = ti.astype(jnp.float32)                 # targets.float()
        # numerically stable binary_cross_entropy_with_logits (unweighted):
        #   max(x, 0) - x*y + log(1 + exp(-|x|))
        bce = jnp.maximum(x, 0.0) - x * tf + jnp.log1p(jnp.exp(-jnp.abs(x)))

        block_start = (c * inner_steps + i) * blk_elems

        def accumulate(valid):
            if valid is None:                        # fully in-bounds block
                is_pos = ti == 1
                is_neg = ti == 0
                bce_all = bce
            else:                                    # ragged / duplicate block
                is_pos = jnp.logical_and(valid, ti == 1)
                is_neg = jnp.logical_and(valid, ti == 0)
                bce_all = jnp.where(valid, bce, 0.0)
            bce_pos = jnp.where(is_pos, bce, 0.0)
            # fold (tr,128) -> (8,128): elementwise VPU adds across vregs only.
            pcnt_ref[...] += jnp.sum(is_pos.astype(jnp.float32).reshape(sh3), axis=0)
            ncnt_ref[...] += jnp.sum(is_neg.astype(jnp.float32).reshape(sh3), axis=0)
            bpos_ref[...] += jnp.sum(bce_pos.reshape(sh3), axis=0)
            ball_ref[...] += jnp.sum(bce_all.reshape(sh3), axis=0)

        block_full = block_start + blk_elems <= n

        @pl.when(block_full)
        def _full():
            accumulate(None)

        @pl.when(jnp.logical_not(block_full))
        def _ragged():
            row_iota = jax.lax.broadcasted_iota(jnp.int32, (tr, _LANES), 0)
            lane_iota = jax.lax.broadcasted_iota(jnp.int32, (tr, _LANES), 1)
            gidx = block_start + row_iota * _LANES + lane_iota
            accumulate(gidx < n)

    return kernel


def class_balanced_loss(inputs, targets, beta=0.8, reduction='mean'):
    n = int(inputs.size)
    x = inputs.reshape(-1)
    t = targets.reshape(-1).astype(jnp.int8)     # targets.long() for binary labels

    align = _ROW_ALIGN * _LANES
    n_pad = (-n) % align
    if n_pad:                                    # tiny tail pad only (< 4096 elems)
        x = jnp.pad(x, (0, n_pad))
        t = jnp.pad(t, (0, n_pad))
    rows = (n + n_pad) // _LANES                 # multiple of 32
    x2 = x.reshape(rows, _LANES)
    t2 = t.reshape(rows, _LANES)

    tr = min(rows, _TR_MAX)                      # block rows (full array or 2048)
    num_blocks = (rows + tr - 1) // tr
    inner = (num_blocks + _CORE_SPLITS - 1) // _CORE_SPLITS

    def in_map(c, i):
        # clamp so the (possibly) unused trailing block of the second core split
        # re-reads a valid block; it is fully masked out in-kernel.
        return (jnp.minimum(c * inner + i, num_blocks - 1), 0)

    acc_spec = pl.BlockSpec((_SUB, _LANES), lambda c, i: (c, 0))
    acc_shape = jax.ShapeDtypeStruct((_CORE_SPLITS * _SUB, _LANES), jnp.float32)

    kernel = _make_kernel(n, tr, inner)

    pcnt, ncnt, bpos, ball = pl.pallas_call(
        kernel,
        grid_spec=pltpu.PrefetchScalarGridSpec(
            num_scalar_prefetch=0,
            grid=(_CORE_SPLITS, inner),
            in_specs=[pl.BlockSpec((tr, _LANES), in_map),
                      pl.BlockSpec((tr, _LANES), in_map)],
            out_specs=[acc_spec, acc_spec, acc_spec, acc_spec],
        ),
        out_shape=[acc_shape, acc_shape, acc_shape, acc_shape],
        compiler_params=pltpu.CompilerParams(
            dimension_semantics=("parallel", "arbitrary")),
    )(x2, t2)

    # one-time cross-lane reduce on tiny (16,128) partials (plain XLA).
    p_cnt = jnp.sum(pcnt)
    n_cnt = jnp.sum(ncnt)
    b_pos = jnp.sum(bpos)
    b_all = jnp.sum(ball)
    b_oth = b_all - b_pos                        # BCE sum over everything not ==1

    num_pos = jnp.maximum(p_cnt, 1.0)
    num_neg = jnp.maximum(n_cnt, 1.0)
    beta_f = jnp.float32(beta)
    pos_w = (1.0 - beta_f) / (1.0 - jnp.power(beta_f, num_pos))
    neg_w = (1.0 - beta_f) / (1.0 - jnp.power(beta_f, num_neg))

    total = pos_w * b_pos + neg_w * b_oth
    if reduction == 'mean':
        return total / jnp.float32(n)
    elif reduction == 'sum':
        return total
    else:
        # TODO(synk): reduction='none' (per-element weighted loss output) not implemented.
        raise NotImplementedError("only 'mean' and 'sum' reductions supported")


def _reference_loss(inputs, targets, beta=0.8):
    """Pure-JAX replica of the PyTorch module (reduction='mean')."""
    x = inputs.astype(jnp.float32)
    ti = targets.astype(jnp.int32)
    tf = ti.astype(jnp.float32)
    num_pos = jnp.maximum(jnp.sum(ti == 1), 1).astype(jnp.float32)
    num_neg = jnp.maximum(jnp.sum(ti == 0), 1).astype(jnp.float32)
    pos_w = (1.0 - beta) / (1.0 - jnp.power(jnp.float32(beta), num_pos))
    neg_w = (1.0 - beta) / (1.0 - jnp.power(jnp.float32(beta), num_neg))
    w = jnp.where(ti == 1, pos_w, neg_w)
    bce = jnp.maximum(x, 0.0) - x * tf + jnp.log1p(jnp.exp(-jnp.abs(x)))
    return jnp.mean(w * bce)


if __name__ == "__main__":
    key = jax.random.PRNGKey(0)
    k1, k2 = jax.random.split(key)
    # Synthetic NCHW logits + binary targets (no learned params in this module).
    inputs = jax.random.normal(k1, (2, 4, 16, 16), dtype=jnp.float32)
    targets = (jax.random.uniform(k2, (2, 4, 16, 16)) > 0.7).astype(jnp.float32)

    loss = class_balanced_loss(inputs, targets, beta=0.8, reduction='mean')
    loss = jax.block_until_ready(loss)

    ref = _reference_loss(inputs, targets, beta=0.8)
    assert jnp.allclose(loss, ref, rtol=1e-5, atol=1e-6), (float(loss), float(ref))
    print("KERNEL_OK")
</pallas_src>

<mosaic_0001>
module attributes {stable_mosaic.version = 11 : i64} {
  func.func @kernel(%arg0: i32, %arg1: i32, %arg2: memref<32x128xf32, #tpu.memory_space<vmem>>, %arg3: memref<32x128xi8, #tpu.memory_space<vmem>>, %arg4: memref<8x128xf32, #tpu.memory_space<vmem>>, %arg5: memref<8x128xf32, #tpu.memory_space<vmem>>, %arg6: memref<8x128xf32, #tpu.memory_space<vmem>>, %arg7: memref<8x128xf32, #tpu.memory_space<vmem>>) attributes {dimension_semantics = [#tpu.dimension_semantics<parallel>, #tpu.dimension_semantics<arbitrary>], iteration_bounds = array<i64: 2, 1>, scalar_prefetch = 0 : i64, scratch_operands = 0 : i64, tpu.core_type = #tpu.core_type<tc>, window_params = [{transform_indices = @transform_0, window_bounds = array<i64: 32, 128>}, {transform_indices = @transform_1, window_bounds = array<i64: 32, 128>}, {transform_indices = @transform_2, window_bounds = array<i64: 8, 128>}, {transform_indices = @transform_3, window_bounds = array<i64: 8, 128>}, {transform_indices = @transform_4, window_bounds = array<i64: 8, 128>}, {transform_indices = @transform_5, window_bounds = array<i64: 8, 128>}]} {
    %c0_i32 = arith.constant 0 : i32
    %0 = arith.cmpi eq, %arg1, %c0_i32 : i32
    %1 = arith.extui %0 : i1 to i32
    %c0_i32_0 = arith.constant 0 : i32
    %2 = arith.cmpi ne, %1, %c0_i32_0 : i32
    scf.if %2 {
      %cst_8 = arith.constant 0.000000e+00 : f32
      %27 = vector.broadcast %cst_8 : f32 to vector<8x128xf32>
      %c0_9 = arith.constant 0 : index
      %c0_10 = arith.constant 0 : index
      %28 = vector.load %arg4[%c0_9, %c0_10] : memref<8x128xf32, #tpu.memory_space<vmem>>, vector<8x128xf32>
      tpu.vector_store %arg4[%c0_9, %c0_10], %27 {strides = array<i32>} : memref<8x128xf32, #tpu.memory_space<vmem>>, vector<8x128xf32>,
      %cst_11 = arith.constant 0.000000e+00 : f32
      %29 = vector.broadcast %cst_11 : f32 to vector<8x128xf32>
      %c0_12 = arith.constant 0 : index
      %c0_13 = arith.constant 0 : index
      %30 = vector.load %arg5[%c0_12, %c0_13] : memref<8x128xf32, #tpu.memory_space<vmem>>, vector<8x128xf32>
      tpu.vector_store %arg5[%c0_12, %c0_13], %29 {strides = array<i32>} : memref<8x128xf32, #tpu.memory_space<vmem>>, vector<8x128xf32>,
      %cst_14 = arith.constant 0.000000e+00 : f32
      %31 = vector.broadcast %cst_14 : f32 to vector<8x128xf32>
      %c0_15 = arith.constant 0 : index
      %c0_16 = arith.constant 0 : index
      %32 = vector.load %arg6[%c0_15, %c0_16] : memref<8x128xf32, #tpu.memory_space<vmem>>, vector<8x128xf32>
      tpu.vector_store %arg6[%c0_15, %c0_16], %31 {strides = array<i32>} : memref<8x128xf32, #tpu.memory_space<vmem>>, vector<8x128xf32>,
      %cst_17 = arith.constant 0.000000e+00 : f32
      %33 = vector.broadcast %cst_17 : f32 to vector<8x128xf32>
      %c0_18 = arith.constant 0 : index
      %c0_19 = arith.constant 0 : index
      %34 = vector.load %arg7[%c0_18, %c0_19] : memref<8x128xf32, #tpu.memory_space<vmem>>, vector<8x128xf32>
      tpu.vector_store %arg7[%c0_18, %c0_19], %33 {strides = array<i32>} : memref<8x128xf32, #tpu.memory_space<vmem>>, vector<8x128xf32>,
    } else {
    }
    %c0 = arith.constant 0 : index
    %c0_1 = arith.constant 0 : index
    %3 = vector.load %arg2[%c0, %c0_1] : memref<32x128xf32, #tpu.memory_space<vmem>>, vector<32x128xf32>
    %c0_2 = arith.constant 0 : index
    %c0_3 = arith.constant 0 : index
    %4 = vector.load %arg3[%c0_2, %c0_3] : memref<32x128xi8, #tpu.memory_space<vmem>>, vector<32x128xi8>
    %5 = arith.extsi %4 : vector<32x128xi8> to vector<32x128xi32>
    %6 = arith.sitofp %5 : vector<32x128xi32> to vector<32x128xf32>
    %cst = arith.constant 0.000000e+00 : f32
    %7 = vector.broadcast %cst : f32 to vector<32x128xf32>
    %8 = arith.maximumf %3, %7 : vector<32x128xf32>
    %9 = arith.mulf %3, %6 : vector<32x128xf32>
    %10 = arith.subf %8, %9 : vector<32x128xf32>
    %11 = math.absf %3 : vector<32x128xf32>
    %cst_4 = arith.constant 0.000000e+00 : f32
    %12 = vector.broadcast %cst_4 : f32 to vector<32x128xf32>
    %13 = arith.subf %12, %11 : vector<32x128xf32>
    %14 = math.exp %13 : vector<32x128xf32>
    %15 = math.log1p %14 : vector<32x128xf32>
    %16 = arith.addf %10, %15 : vector<32x128xf32>
    %c1_i32 = arith.constant 1 : i32
    %17 = arith.muli %arg0, %c1_i32 : i32
    %18 = arith.addi %17, %arg1 : i32
    %c4096_i32 = arith.constant 4096 : i32
    %19 = arith.muli %18, %c4096_i32 : i32
    %c4096_i32_5 = arith.constant 4096 : i32
    %20 = arith.addi %19, %c4096_i32_5 : i32
    %c2048_i32 = arith.constant 2048 : i32
    %21 = arith.cmpi sle, %20, %c2048_i32 : i32
    %22 = arith.extui %21 : i1 to i32
    %c0_i32_6 = arith.constant 0 : i32
    %23 = arith.cmpi ne, %22, %c0_i32_6 : i32
    scf.if %23 {
      %c1_i32_8 = arith.constant 1 : i32
      %27 = vector.broadcast %c1_i32_8 : i32 to vector<32x128xi32>
      %28 = arith.cmpi eq, %5, %27 : vector<32x128xi32>
      %c0_i32_9 = arith.constant 0 : i32
      %29 = vector.broadcast %c0_i32_9 : i32 to vector<32x128xi32>
      %30 = arith.cmpi eq, %5, %29 : vector<32x128xi32>
      %cst_10 = arith.constant 0.000000e+00 : f32
      %31 = vector.broadcast %cst_10 : f32 to vector<32x128xf32>
      %32 = arith.select %28, %16, %31 : vector<32x128xi1>, vector<32x128xf32>
      %c0_11 = arith.constant 0 : index
      %c0_12 = arith.constant 0 : index
      %33 = vector.load %arg4[%c0_11, %c0_12] : memref<8x128xf32, #tpu.memory_space<vmem>>, vector<8x128xf32>
      %34 = arith.extui %28 : vector<32x128xi1> to vector<32x128xi32>
      %35 = arith.sitofp %34 : vector<32x128xi32> to vector<32x128xf32>
      %36 = vector.shape_cast %35 : vector<32x128xf32> to vector<4x8x128xf32>
      %cst_13 = arith.constant dense<0.000000e+00> : vector<8x128xf32>
      %37 = vector.multi_reduction <add>, %36, %cst_13 [0] : vector<4x8x128xf32> to vector<8x128xf32>
      %38 = arith.addf %33, %37 : vector<8x128xf32>
      %c0_14 = arith.constant 0 : index
      %c0_15 = arith.constant 0 : index
      %39 = vector.load %arg4[%c0_14, %c0_15] : memref<8x128xf32, #tpu.memory_space<vmem>>, vector<8x128xf32>
      tpu.vector_store %arg4[%c0_14, %c0_15], %38 {strides = array<i32>} : memref<8x128xf32, #tpu.memory_space<vmem>>, vector<8x128xf32>,
      %c0_16 = arith.constant 0 : index
      %c0_17 = arith.constant 0 : index
      %40 = vector.load %arg5[%c0_16, %c0_17] : memref<8x128xf32, #tpu.memory_space<vmem>>, vector<8x128xf32>
      %41 = arith.extui %30 : vector<32x128xi1> to vector<32x128xi32>
      %42 = arith.sitofp %41 : vector<32x128xi32> to vector<32x128xf32>
      %43 = vector.shape_cast %42 : vector<32x128xf32> to vector<4x8x128xf32>
      %cst_18 = arith.constant dense<0.000000e+00> : vector<8x128xf32>
      %44 = vector.multi_reduction <add>, %43, %cst_18 [0] : vector<4x8x128xf32> to vector<8x128xf32>
      %45 = arith.addf %40, %44 : vector<8x128xf32>
      %c0_19 = arith.constant 0 : index
      %c0_20 = arith.constant 0 : index
      %46 = vector.load %arg5[%c0_19, %c0_20] : memref<8x128xf32, #tpu.memory_space<vmem>>, vector<8x128xf32>
      tpu.vector_store %arg5[%c0_19, %c0_20], %45 {strides = array<i32>} : memref<8x128xf32, #tpu.memory_space<vmem>>, vector<8x128xf32>,
      %c0_21 = arith.constant 0 : index
      %c0_22 = arith.constant 0 : index
      %47 = vector.load %arg6[%c0_21, %c0_22] : memref<8x128xf32, #tpu.memory_space<vmem>>, vector<8x128xf32>
      %48 = vector.shape_cast %32 : vector<32x128xf32> to vector<4x8x128xf32>
      %cst_23 = arith.constant dense<0.000000e+00> : vector<8x128xf32>
      %49 = vector.multi_reduction <add>, %48, %cst_23 [0] : vector<4x8x128xf32> to vector<8x128xf32>
      %50 = arith.addf %47, %49 : vector<8x128xf32>
      %c0_24 = arith.constant 0 : index
      %c0_25 = arith.constant 0 : index
      %51 = vector.load %arg6[%c0_24, %c0_25] : memref<8x128xf32, #tpu.memory_space<vmem>>, vector<8x128xf32>
      tpu.vector_store %arg6[%c0_24, %c0_25], %50 {strides = array<i32>} : memref<8x128xf32, #tpu.memory_space<vmem>>, vector<8x128xf32>,
      %c0_26 = arith.constant 0 : index
      %c0_27 = arith.constant 0 : index
      %52 = vector.load %arg7[%c0_26, %c0_27] : memref<8x128xf32, #tpu.memory_space<vmem>>, vector<8x128xf32>
      %53 = vector.shape_cast %16 : vector<32x128xf32> to vector<4x8x128xf32>
      %cst_28 = arith.constant dense<0.000000e+00> : vector<8x128xf32>
      %54 = vector.multi_reduction <add>, %53, %cst_28 [0] : vector<4x8x128xf32> to vector<8x128xf32>
      %55 = arith.addf %52, %54 : vector<8x128xf32>
      %c0_29 = arith.constant 0 : index
      %c0_30 = arith.constant 0 : index
      %56 = vector.load %arg7[%c0_29, %c0_30] : memref<8x128xf32, #tpu.memory_space<vmem>>, vector<8x128xf32>
      tpu.vector_store %arg7[%c0_29, %c0_30], %55 {strides = array<i32>} : memref<8x128xf32, #tpu.memory_space<vmem>>, vector<8x128xf32>,
    } else {
    }
    %true = arith.constant true
    %24 = arith.xori %21, %true : i1
    %25 = arith.extui %24 : i1 to i32
    %c0_i32_7 = arith.constant 0 : i32
    %26 = arith.cmpi ne, %25, %c0_i32_7 : i32
    scf.if %26 {
      %27 = tpu.iota {dimensions = array<i32: 0>} : vector<32x128xi32>
      %28 = tpu.iota {dimensions = array<i32: 1>} : vector<32x128xi32>
      %c128_i32 = arith.constant 128 : i32
      %29 = vector.broadcast %c128_i32 : i32 to vector<32x128xi32>
      %30 = arith.muli %27, %29 : vector<32x128xi32>
      %31 = vector.broadcast %19 : i32 to vector<32x128xi32>
      %32 = arith.addi %31, %30 : vector<32x128xi32>
      %33 = arith.addi %32, %28 : vector<32x128xi32>
      %c2048_i32_8 = arith.constant 2048 : i32
      %34 = vector.broadcast %c2048_i32_8 : i32 to vector<32x128xi32>
      %35 = arith.cmpi slt, %33, %34 : vector<32x128xi32>
      %c1_i32_9 = arith.constant 1 : i32
      %36 = vector.broadcast %c1_i32_9 : i32 to vector<32x128xi32>
      %37 = arith.cmpi eq, %5, %36 : vector<32x128xi32>
      %38 = arith.andi %35, %37 : vector<32x128xi1>
      %c0_i32_10 = arith.constant 0 : i32
      %39 = vector.broadcast %c0_i32_10 : i32 to vector<32x128xi32>
      %40 = arith.cmpi eq, %5, %39 : vector<32x128xi32>
      %41 = arith.andi %35, %40 : vector<32x128xi1>
      %cst_11 = arith.constant 0.000000e+00 : f32
      %42 = vector.broadcast %cst_11 : f32 to vector<32x128xf32>
      %43 = arith.select %35, %16, %42 : vector<32x128xi1>, vector<32x128xf32>
      %cst_12 = arith.constant 0.000000e+00 : f32
      %44 = vector.broadcast %cst_12 : f32 to vector<32x128xf32>
      %45 = arith.select %38, %16, %44 : vector<32x128xi1>, vector<32x128xf32>
      %c0_13 = arith.constant 0 : index
      %c0_14 = arith.constant 0 : index
      %46 = vector.load %arg4[%c0_13, %c0_14] : memref<8x128xf32, #tpu.memory_space<vmem>>, vector<8x128xf32>
      %47 = arith.extui %38 : vector<32x128xi1> to vector<32x128xi32>
      %48 = arith.sitofp %47 : vector<32x128xi32> to vector<32x128xf32>
      %49 = vector.shape_cast %48 : vector<32x128xf32> to vector<4x8x128xf32>
      %cst_15 = arith.constant dense<0.000000e+00> : vector<8x128xf32>
      %50 = vector.multi_reduction <add>, %49, %cst_15 [0] : vector<4x8x128xf32> to vector<8x128xf32>
      %51 = arith.addf %46, %50 : vector<8x128xf32>
      %c0_16 = arith.constant 0 : index
      %c0_17 = arith.constant 0 : index
      %52 = vector.load %arg4[%c0_16, %c0_17] : memref<8x128xf32, #tpu.memory_space<vmem>>, vector<8x128xf32>
      tpu.vector_store %arg4[%c0_16, %c0_17], %51 {strides = array<i32>} : memref<8x128xf32, #tpu.memory_space<vmem>>, vector<8x128xf32>,
      %c0_18 = arith.constant 0 : index
      %c0_19 = arith.constant 0 : index
      %53 = vector.load %arg5[%c0_18, %c0_19] : memref<8x128xf32, #tpu.memory_space<vmem>>, vector<8x128xf32>
      %54 = arith.extui %41 : vector<32x128xi1> to vector<32x128xi32>
      %55 = arith.sitofp %54 : vector<32x128xi32> to vector<32x128xf32>
      %56 = vector.shape_cast %55 : vector<32x128xf32> to vector<4x8x128xf32>
      %cst_20 = arith.constant dense<0.000000e+00> : vector<8x128xf32>
      %57 = vector.multi_reduction <add>, %56, %cst_20 [0] : vector<4x8x128xf32> to vector<8x128xf32>
      %58 = arith.addf %53, %57 : vector<8x128xf32>
      %c0_21 = arith.constant 0 : index
      %c0_22 = arith.constant 0 : index
      %59 = vector.load %arg5[%c0_21, %c0_22] : memref<8x128xf32, #tpu.memory_space<vmem>>, vector<8x128xf32>
      tpu.vector_store %arg5[%c0_21, %c0_22], %58 {strides = array<i32>} : memref<8x128xf32, #tpu.memory_space<vmem>>, vector<8x128xf32>,
      %c0_23 = arith.constant 0 : index
      %c0_24 = arith.constant 0 : index
      %60 = vector.load %arg6[%c0_23, %c0_24] : memref<8x128xf32, #tpu.memory_space<vmem>>, vector<8x128xf32>
      %61 = vector.shape_cast %45 : vector<32x128xf32> to vector<4x8x128xf32>
      %cst_25 = arith.constant dense<0.000000e+00> : vector<8x128xf32>
      %62 = vector.multi_reduction <add>, %61, %cst_25 [0] : vector<4x8x128xf32> to vector<8x128xf32>
      %63 = arith.addf %60, %62 : vector<8x128xf32>
      %c0_26 = arith.constant 0 : index
      %c0_27 = arith.constant 0 : index
      %64 = vector.load %arg6[%c0_26, %c0_27] : memref<8x128xf32, #tpu.memory_space<vmem>>, vector<8x128xf32>
      tpu.vector_store %arg6[%c0_26, %c0_27], %63 {strides = array<i32>} : memref<8x128xf32, #tpu.memory_space<vmem>>, vector<8x128xf32>,
      %c0_28 = arith.constant 0 : index
      %c0_29 = arith.constant 0 : index
      %65 = vector.load %arg7[%c0_28, %c0_29] : memref<8x128xf32, #tpu.memory_space<vmem>>, vector<8x128xf32>
      %66 = vector.shape_cast %43 : vector<32x128xf32> to vector<4x8x128xf32>
      %cst_30 = arith.constant dense<0.000000e+00> : vector<8x128xf32>
      %67 = vector.multi_reduction <add>, %66, %cst_30 [0] : vector<4x8x128xf32> to vector<8x128xf32>
      %68 = arith.addf %65, %67 : vector<8x128xf32>
      %c0_31 = arith.constant 0 : index
      %c0_32 = arith.constant 0 : index
      %69 = vector.load %arg7[%c0_31, %c0_32] : memref<8x128xf32, #tpu.memory_space<vmem>>, vector<8x128xf32>
      tpu.vector_store %arg7[%c0_31, %c0_32], %68 {strides = array<i32>} : memref<8x128xf32, #tpu.memory_space<vmem>>, vector<8x128xf32>,
    } else {
    }
    return
  }
  func.func @transform_0(%arg0: i32, %arg1: i32) -> (i32, i32) {
    %c1_i32 = arith.constant 1 : i32
    %0 = arith.muli %arg0, %c1_i32 : i32
    %1 = arith.addi %0, %arg1 : i32
    %c0_i32 = arith.constant 0 : i32
    %2 = arith.minsi %1, %c0_i32 : i32
    %c0_i32_0 = arith.constant 0 : i32
    %c0_i32_1 = arith.constant 0 : i32
    return %2, %c0_i32_0 : i32, i32
  }
  func.func @transform_1(%arg0: i32, %arg1: i32) -> (i32, i32) {
    %c1_i32 = arith.constant 1 : i32
    %0 = arith.muli %arg0, %c1_i32 : i32
    %1 = arith.addi %0, %arg1 : i32
    %c0_i32 = arith.constant 0 : i32
    %2 = arith.minsi %1, %c0_i32 : i32
    %c0_i32_0 = arith.constant 0 : i32
    %c0_i32_1 = arith.constant 0 : i32
    return %2, %c0_i32_0 : i32, i32
  }
  func.func @transform_2(%arg0: i32, %arg1: i32) -> (i32, i32) {
    %c0_i32 = arith.constant 0 : i32
    %c0_i32_0 = arith.constant 0 : i32
    return %arg0, %c0_i32 : i32, i32
  }
  func.func @transform_3(%arg0: i32, %arg1: i32) -> (i32, i32) {
    %c0_i32 = arith.constant 0 : i32
    %c0_i32_0 = arith.constant 0 : i32
    return %arg0, %c0_i32 : i32, i32
  }
  func.func @transform_4(%arg0: i32, %arg1: i32) -> (i32, i32) {
    %c0_i32 = arith.constant 0 : i32
    %c0_i32_0 = arith.constant 0 : i32
    return %arg0, %c0_i32 : i32, i32
  }
  func.func @transform_5(%arg0: i32, %arg1: i32) -> (i32, i32) {
    %c0_i32 = arith.constant 0 : i32
    %c0_i32_0 = arith.constant 0 : i32
    return %arg0, %c0_i32 : i32, i32
  }
}

</mosaic_0001>

<llo_original>
// kernel: tpu_custom_call.1
$region0: #{tpu_custom_call.1}
  #allocation0 [shape = 'u32[]', space=smem, size = 0x4, offset = 0x4, fixed_abs, tag = 'smem constant byte address 0x4 - core index']
  #allocation1 [shape = 'u32[72,128]{1,0:T(1,128)}', space=vmem, size = 0x9000, scoped, tag = 'internal scratch']
  %s0 = inlined_call_operand.hbm [shape: f32[32,128], index: 0, kind: input, shape index: {}]
  %s1 = inlined_call_operand.hbm [shape: s8[32,128], index: 1, kind: input, shape index: {}]
  %s2 = inlined_call_operand.hbm [shape: f32[16,128], index: 2, kind: output, shape index: {0}]
  %s3 = inlined_call_operand.hbm [shape: f32[16,128], index: 3, kind: output, shape index: {1}]
  %s4 = inlined_call_operand.hbm [shape: f32[16,128], index: 4, kind: output, shape index: {2}]
  %s5 = inlined_call_operand.hbm [shape: f32[16,128], index: 5, kind: output, shape index: {3}]
  %6 = xla_tuple %s2, %s3, %s4, %s5
  %s7 = sld [smem:[#allocation0]]
  $region85: #{tpu_custom_call.1} parent=0
    _
  %s9 = ssub.s32 1, %s7
  %s10 = scalar_select 0, %s9, %s7
  $region1: #{tpu_custom_call.1} parent=0
    #allocation2 [shape = 'u8[32768]{0}', space=vmem, size = 0x8000, scoped, tag = 'input window, operand 0']
    #allocation3 [shape = 's32[2]{0}', space=sflag, size = 0x8, scoped, tag = 'scoped memory for tpu_custom_call.1']
    #allocation4 [shape = 's32[2]{0}', space=sflag, size = 0x8, scoped, tag = 'scoped memory for tpu_custom_call.1']
    #allocation5 [shape = 'u8[8192]{0}', space=vmem, size = 0x2000, scoped, tag = 'input window, operand 1']
    #allocation6 [shape = 's32[2]{0}', space=sflag, size = 0x8, scoped, tag = 'scoped memory for tpu_custom_call.1']
    #allocation7 [shape = 'u8[8192]{0}', space=vmem, size = 0x2000, scoped, tag = 'output window, operand 0']
    #allocation8 [shape = 'u8[8192]{0}', space=vmem, size = 0x2000, scoped, tag = 'output window, operand 1']
    #allocation9 [shape = 's32[2]{0}', space=sflag, size = 0x8, scoped, tag = 'scoped memory for tpu_custom_call.1']
    #allocation10 [shape = 'u8[8192]{0}', space=vmem, size = 0x2000, scoped, tag = 'output window, operand 2']
    #allocation11 [shape = 'u8[8192]{0}', space=vmem, size = 0x2000, scoped, tag = 'output window, operand 3']
    #allocation12 [shape = 's32[2]{0}', space=sflag, size = 0x8, scoped, tag = 'scoped memory for tpu_custom_call.1']
    %11 = vsyncpa [#allocation3], 0
    %s12 = scalar_lea.sflag [#allocation3], 1
    %13 = vsyncpa %s12, 0
    %14 = vsyncpa [#allocation6], 0
    %s15 = scalar_lea.sflag [#allocation6], 1
    %16 = vsyncpa %s15, 0
    %17 = vsyncpa [#allocation4], 0
    %s18 = scalar_lea.sflag [#allocation4], 1
    %19 = vsyncpa %s18, 0
    %20 = vsyncpa [#allocation9], 0
    %s21 = scalar_lea.sflag [#allocation9], 1
    %22 = vsyncpa %s21, 0
    %23 = vsyncpa [#allocation12], 0
    %s24 = scalar_lea.sflag [#allocation12], 1
    %25 = vsyncpa %s24, 0
    loop: start=0, step=1, limit=4
    $region2: #{tpu_custom_call.1} parent=1 // loop_pre_header
      _
    $region3: #{tpu_custom_call.1} parent=1 // loop_header
      %s27 = sphi 0, %s31
      %p28 = scmp.ge.s32.totalorder %s27, 4
      %s34 = sphi 0, %s46
      %s35 = sphi 0, %s42
      %s36 = sphi 0, %s34
      %s37 = sphi 0, %s35
      %s38 = sphi 0, %s36
      %s39 = sphi 0, %s37
      %s55 = sphi 0, %s57
      %s58 = sphi 0, %s55
      %s59 = sphi 0, %s58
      %s75 = sphi 0, %s59
      %s87 = sphi 0, %s89
      %s90 = sphi 0, %s87
      %s91 = sphi 0, %s90
      %s107 = sphi 0, %s91
      %s113 = sphi 0, %s115
      %s116 = sphi 0, %s113
      %s117 = sphi 0, %s116
      %s133 = sphi 0, %s117
      %s139 = sphi 0, %s141
      %s142 = sphi 0, %s139
      %s143 = sphi 0, %s142
      %s159 = sphi 0, %s143
      %s165 = sphi 0, %s167
      %s168 = sphi 0, %s165
      %s169 = sphi 0, %s168
      %s185 = sphi 0, %s169
      %s191 = sphi 0, %s193
      %s194 = sphi 0, %s191
      %s195 = sphi 0, %s194
      %s211 = sphi 0, %s195
    $region4: #{tpu_custom_call.1} parent=1 // loop_header_branch
      %30 = sbr.rel (%p28) target = $region8
    $region5: #{tpu_custom_call.1} parent=1 // loop_body
      %s32 = ssub.s32 %s27, 1
      %s33 = ssub.s32 %s27, 2
      %s40 = sadd.s32 1, %s35
      %p41 = scmp.ge.s32.totalorder %s40, 1
      %s42 = scalar_select %p41, 0, %s40
      %s43 = sadd.s32 1, %s34
      %s44 = scalar_select %p41, %s43, %s34
      %p45 = scmp.ge.s32.totalorder %s44, 2
      %s46 = scalar_select %p45, 0, %s44
      %s47 = sadd.s32 %s34, %s35
      %p48 = scmp.lt.s32.totalorder %s47, 0
      %s49 = scalar_select %p48, %s47, 0
      %s50 = sadd.s32 %s46, %s42
      %p51 = scmp.lt.s32.totalorder %s50, 0
      %s52 = scalar_select %p51, %s50, 0
      %s53 = ssub.s32 %s49, %s52
      %p54 = scmp.eq.s32.totalorder %s53, 0
      %s56 = sadd.s32 %s55, 1
      %s57 = scalar_select %p54, %s55, %s56
      %p60 = pneg %p54
      %p61 = scmp.eq.s32.totalorder %s27, 1
      %p62 = por %p60, %p61
      %p63 = scmp.ne.s32.totalorder %s55, %s58
      %p64 = scmp.eq.s32.totalorder %s27, 0
      %p65 = por %p63, %p64
      %p66 = scmp.ne.s32.totalorder %s55, %s58
      %p67 = scmp.eq.s32.totalorder %s32, 1
      %p68 = por %p66, %p67
      %p69 = scmp.ne.s32.totalorder %s58, %s59
      %p70 = scmp.eq.s32.totalorder %s32, 0
      %p71 = por %p69, %p70
      %p72 = scmp.ne.s32.totalorder %s58, %s59
      %p73 = scmp.eq.s32.totalorder %s33, 1
      %p74 = por %p72, %p73
      %p76 = scmp.ne.s32.totalorder %s59, %s75
      %p77 = scmp.eq.s32.totalorder %s33, 0
      %p78 = por %p76, %p77
      %s79 = sadd.s32 %s34, %s35
      %p80 = scmp.lt.s32.totalorder %s79, 0
      %s81 = scalar_select %p80, %s79, 0
      %s82 = sadd.s32 %s46, %s42
      %p83 = scmp.lt.s32.totalorder %s82, 0
      %s84 = scalar_select %p83, %s82, 0
      %s85 = ssub.s32 %s81, %s84
      %p86 = scmp.eq.s32.totalorder %s85, 0
      %s88 = sadd.s32 %s87, 1
      %s89 = scalar_select %p86, %s87, %s88
      %p92 = pneg %p86
      %p93 = scmp.eq.s32.totalorder %s27, 1
      %p94 = por %p92, %p93
      %p95 = scmp.ne.s32.totalorder %s87, %s90
      %p96 = scmp.eq.s32.totalorder %s27, 0
      %p97 = por %p95, %p96
      %p98 = scmp.ne.s32.totalorder %s87, %s90
      %p99 = scmp.eq.s32.totalorder %s32, 1
      %p100 = por %p98, %p99
      %p101 = scmp.ne.s32.totalorder %s90, %s91
      %p102 = scmp.eq.s32.totalorder %s32, 0
      %p103 = por %p101, %p102
      %p104 = scmp.ne.s32.totalorder %s90, %s91
      %p105 = scmp.eq.s32.totalorder %s33, 1
      %p106 = por %p104, %p105
      %p108 = scmp.ne.s32.totalorder %s91, %s107
      %p109 = scmp.eq.s32.totalorder %s33, 0
      %p110 = por %p108, %p109
      %s111 = ssub.s32 %s34, %s46
      %p112 = scmp.eq.s32.totalorder %s111, 0
      %s114 = sadd.s32 %s113, 1
      %s115 = scalar_select %p112, %s113, %s114
      %p118 = pneg %p112
      %p119 = scmp.eq.s32.totalorder %s27, 1
      %p120 = por %p118, %p119
      %p121 = scmp.ne.s32.totalorder %s113, %s116
      %p122 = scmp.eq.s32.totalorder %s27, 0
      %p123 = por %p121, %p122
      %p124 = scmp.ne.s32.totalorder %s113, %s116
      %p125 = scmp.eq.s32.totalorder %s32, 1
      %p126 = por %p124, %p125
      %p127 = scmp.ne.s32.totalorder %s116, %s117
      %p128 = scmp.eq.s32.totalorder %s32, 0
      %p129 = por %p127, %p128
      %p130 = scmp.ne.s32.totalorder %s116, %s117
      %p131 = scmp.eq.s32.totalorder %s33, 1
      %p132 = por %p130, %p131
      %p134 = scmp.ne.s32.totalorder %s117, %s133
      %p135 = scmp.eq.s32.totalorder %s33, 0
      %p136 = por %p134, %p135
      %s137 = ssub.s32 %s34, %s46
      %p138 = scmp.eq.s32.totalorder %s137, 0
      %s140 = sadd.s32 %s139, 1
      %s141 = scalar_select %p138, %s139, %s140
      %p144 = pneg %p138
      %p145 = scmp.eq.s32.totalorder %s27, 1
      %p146 = por %p144, %p145
      %p147 = scmp.ne.s32.totalorder %s139, %s142
      %p148 = scmp.eq.s32.totalorder %s27, 0
      %p149 = por %p147, %p148
      %p150 = scmp.ne.s32.totalorder %s139, %s142
      %p151 = scmp.eq.s32.totalorder %s32, 1
      %p152 = por %p150, %p151
      %p153 = scmp.ne.s32.totalorder %s142, %s143
      %p154 = scmp.eq.s32.totalorder %s32, 0
      %p155 = por %p153, %p154
      %p156 = scmp.ne.s32.totalorder %s142, %s143
      %p157 = scmp.eq.s32.totalorder %s33, 1
      %p158 = por %p156, %p157
      %p160 = scmp.ne.s32.totalorder %s143, %s159
      %p161 = scmp.eq.s32.totalorder %s33, 0
      %p162 = por %p160, %p161
      %s163 = ssub.s32 %s34, %s46
      %p164 = scmp.eq.s32.totalorder %s163, 0
      %s166 = sadd.s32 %s165, 1
      %s167 = scalar_select %p164, %s165, %s166
      %p170 = pneg %p164
      %p171 = scmp.eq.s32.totalorder %s27, 1
      %p172 = por %p170, %p171
      %p173 = scmp.ne.s32.totalorder %s165, %s168
      %p174 = scmp.eq.s32.totalorder %s27, 0
      %p175 = por %p173, %p174
      %p176 = scmp.ne.s32.totalorder %s165, %s168
      %p177 = scmp.eq.s32.totalorder %s32, 1
      %p178 = por %p176, %p177
      %p179 = scmp.ne.s32.totalorder %s168, %s169
      %p180 = scmp.eq.s32.totalorder %s32, 0
      %p181 = por %p179, %p180
      %p182 = scmp.ne.s32.totalorder %s168, %s169
      %p183 = scmp.eq.s32.totalorder %s33, 1
      %p184 = por %p182, %p183
      %p186 = scmp.ne.s32.totalorder %s169, %s185
      %p187 = scmp.eq.s32.totalorder %s33, 0
      %p188 = por %p186, %p187
      %s189 = ssub.s32 %s34, %s46
      %p190 = scmp.eq.s32.totalorder %s189, 0
      %s192 = sadd.s32 %s191, 1
      %s193 = scalar_select %p190, %s191, %s192
      %p196 = pneg %p190
      %p197 = scmp.eq.s32.totalorder %s27, 1
      %p198 = por %p196, %p197
      %p199 = scmp.ne.s32.totalorder %s191, %s194
      %p200 = scmp.eq.s32.totalorder %s27, 0
      %p201 = por %p199, %p200
      %p202 = scmp.ne.s32.totalorder %s191, %s194
      %p203 = scmp.eq.s32.totalorder %s32, 1
      %p204 = por %p202, %p203
      %p205 = scmp.ne.s32.totalorder %s194, %s195
      %p206 = scmp.eq.s32.totalorder %s32, 0
      %p207 = por %p205, %p206
      %p208 = scmp.ne.s32.totalorder %s194, %s195
      %p209 = scmp.eq.s32.totalorder %s33, 1
      %p210 = por %p208, %p209
      %p212 = scmp.ne.s32.totalorder %s195, %s211
      %p213 = scmp.eq.s32.totalorder %s33, 0
      %p214 = por %p212, %p213
      %p215 = scmp.le.s32.totalorder 1, %s27
      %p216 = scmp.lt.s32.totalorder %s27, 3
      %p217 = pnand %p215, %p216
      %p218 = pneg %p217
      // Predicated region
      $region9: #{tpu_custom_call.1} parent=5 // pred_check
        _
      $region10: #{tpu_custom_call.1} parent=5 // pred_check_branch
        %220 = sbr.rel (%p217) target = $region12
      $region11: #{tpu_custom_call.1} parent=5 // pred_region
        %s221 = ssub.s32 %s27, 1
      $region12: #{tpu_custom_call.1} parent=5 // pred_fallthru
        _
      %p222 = scmp.lt.s32.totalorder %s27, 2
      // Predicated region
      $region13: #{tpu_custom_call.1} parent=5 // pred_check
        %p223 = pneg %p222
      $region14: #{tpu_custom_call.1} parent=5 // pred_check_branch
        %225 = sbr.rel (%p223) target = $region16
      $region15: #{tpu_custom_call.1} parent=5 // pred_region
        // Predicated region
        $region17: #{tpu_custom_call.1} parent=15 // pred_check
          %p226 = pneg %p65
        $region18: #{tpu_custom_call.1} parent=15 // pred_check_branch
          %228 = sbr.rel (%p226) target = $region20
        $region19: #{tpu_custom_call.1} parent=15 // pred_region
          %s229 = sand.u32 %s55, 1
          %s230 = scalar_lea.sflag [#allocation3], %s229
          %s231 = sand.u32 %s55, 1
          %s232 = smul.addr %s231, 32
          %s233 = scalar_lea.vmem [#allocation2], %s232
          %s234 = sadd.s32 %s34, %s35
          %p235 = scmp.lt.s32.totalorder %s234, 0
          %s236 = scalar_select %p235, %s234, 0
          %s237 = smul.u32 4, %s236
          %239 = vsyncadd %s230, 0
          %s240 = smul.addr %s237, 8
          %s241 = scalar_lea.hbm %s0, %s240
          %s242 = sshll.u32 %s241, 4
          %s243 = int_to_ptr.hbm [resolvable:$true] %s242
          %s244 = sshll.u32 %s233, 4
          %s245 = int_to_ptr.vmem [resolvable:$true] %s244
          %250 = dma.hbm_to_vmem [thread:$0]  %s243, 512, %s245, %s230, 128, 128, 8
        $region20: #{tpu_custom_call.1} parent=15 // pred_fallthru
          _
        // Predicated region
        $region21: #{tpu_custom_call.1} parent=15 // pred_check
          %p251 = pneg %p97
        $region22: #{tpu_custom_call.1} parent=15 // pred_check_branch
          %253 = sbr.rel (%p251) target = $region24
        $region23: #{tpu_custom_call.1} parent=15 // pred_region
          %s254 = sand.u32 %s87, 1
          %s255 = scalar_lea.sflag [#allocation6], %s254
          %s256 = sand.u32 %s87, 1
          %s257 = smul.addr %s256, 8
          %s258 = scalar_lea.vmem [#allocation5], %s257
          %s259 = sadd.s32 %s34, %s35
          %p260 = scmp.lt.s32.totalorder %s259, 0
          %s261 = scalar_select %p260, %s259, 0
          %263 = vsyncadd %s255, 0
          %s264 = smul.addr %s261, 8
          %s265 = scalar_lea.hbm %s1, %s264
          %s267 = sshll.u32 %s265, 4
          %s268 = int_to_ptr.hbm [resolvable:$true] %s267
          %s269 = sshll.u32 %s258, 4
          %s270 = int_to_ptr.vmem [resolvable:$true] %s269
          %272 = dma.hbm_to_vmem [thread:$0]  %s268, 128, %s270, %s255
        $region24: #{tpu_custom_call.1} parent=15 // pred_fallthru
          _
      $region16: #{tpu_custom_call.1} parent=5 // pred_fallthru
        _
      %p273 = scmp.le.s32.totalorder 1, %s27
      %p274 = scmp.lt.s32.totalorder %s27, 3
      %p275 = pnand %p273, %p274
      %p276 = pneg %p275
      // Predicated region
      $region25: #{tpu_custom_call.1} parent=5 // pred_check
        _
      $region26: #{tpu_custom_call.1} parent=5 // pred_check_branch
        %278 = sbr.rel (%p275) target = $region28
      $region27: #{tpu_custom_call.1} parent=5 // pred_region
        %s279 = ssub.s32 %s27, 1
        %s280 = sand.u32 %s58, 1
        %s281 = scalar_lea.sflag [#allocation3], %s280
        %s282 = sand.u32 %s58, 1
        %s283 = smul.addr %s282, 32
        %s284 = scalar_lea.vmem [#allocation2], %s283
        // Predicated region
        $region29: #{tpu_custom_call.1} parent=27 // pred_check
          %p285 = pneg %p71
        $region30: #{tpu_custom_call.1} parent=27 // pred_check_branch
          %287 = sbr.rel (%p285) target = $region32
        $region31: #{tpu_custom_call.1} parent=27 // pred_region
          %289 = dma.done %s281, 512
        $region32: #{tpu_custom_call.1} parent=27 // pred_fallthru
          _
        %s290 = sand.u32 %s90, 1
        %s291 = scalar_lea.sflag [#allocation6], %s290
        %s292 = sand.u32 %s90, 1
        %s293 = smul.addr %s292, 8
        %s294 = scalar_lea.vmem [#allocation5], %s293
        // Predicated region
        $region33: #{tpu_custom_call.1} parent=27 // pred_check
          %p295 = pneg %p103
        $region34: #{tpu_custom_call.1} parent=27 // pred_check_branch
          %297 = sbr.rel (%p295) target = $region36
        $region35: #{tpu_custom_call.1} parent=27 // pred_region
          %299 = dma.done %s291, 128
        $region36: #{tpu_custom_call.1} parent=27 // pred_fallthru
          _
        %s300 = sand.u32 %s58, 1
        %s301 = scalar_lea.sflag [#allocation3], %s300
        %s302 = sand.u32 %s58, 1
        %s303 = smul.addr %s302, 32
        %s304 = scalar_lea.vmem [#allocation2], %s303
        %p305 = pneg %p71
        %p306 = pneg %p68
        %s307 = sand.u32 %s90, 1
        %s308 = scalar_lea.sflag [#allocation6], %s307
        %s309 = sand.u32 %s90, 1
        %s310 = smul.addr %s309, 8
        %s311 = scalar_lea.vmem [#allocation5], %s310
        %p312 = pneg %p103
        %p313 = pneg %p100
        %p314 = pneg %p129
        %p315 = pneg %p126
        %s316 = sand.u32 %s116, 1
        %s317 = scalar_lea.sflag [#allocation4], %s316
        %s318 = sand.u32 %s116, 1
        %s319 = smul.addr %s318, 8
        %s320 = scalar_lea.vmem [#allocation7], %s319
        %p321 = pneg %p155
        %p322 = pneg %p152
        %s323 = sand.u32 %s32, 1
        %s324 = scalar_lea.sflag [#allocation9], %s323
        %s325 = sand.u32 %s142, 1
        %s326 = smul.addr %s325, 8
        %s327 = scalar_lea.vmem [#allocation8], %s326
        %p328 = pneg %p181
        %p329 = pneg %p178
        %s330 = sand.u32 %s32, 1
        %s331 = scalar_lea.sflag [#allocation9], %s330
        %s332 = sand.u32 %s168, 1
        %s333 = smul.addr %s332, 8
        %s334 = scalar_lea.vmem [#allocation10], %s333
        %p335 = pneg %p207
        %p336 = pneg %p204
        %s337 = sand.u32 %s194, 1
        %s338 = scalar_lea.sflag [#allocation12], %s337
        %s339 = sand.u32 %s194, 1
        %s340 = smul.addr %s339, 8
        %s341 = scalar_lea.vmem [#allocation11], %s340
        %s342 = sadd.s32 %s36, %s37
        %p343 = scmp.lt.s32.totalorder %s342, 0
        %s344 = scalar_select %p343, %s342, 0
        %s345 = smul.u32 4, %s344
        %s346 = sadd.s32 %s36, %s37
        %p347 = scmp.lt.s32.totalorder %s346, 0
        %s348 = scalar_select %p347, %s346, 0
        %p349 = scmp.eq.s32.totalorder %s37, 0
        // Predicated region
        $region37: #{tpu_custom_call.1} parent=27 // pred_check
          %p350 = pneg %p349
        $region38: #{tpu_custom_call.1} parent=27 // pred_check_branch
          %352 = sbr.rel (%p350) target = $region40
        $region39: #{tpu_custom_call.1} parent=27 // pred_region
          %353 = vst [vmem:[%s320] sm:$0xff] 0.0
          %354 = vst [vmem:[%s327] sm:$0xff] 0.0
          %355 = vst [vmem:[%s334] sm:$0xff] 0.0
          %356 = vst [vmem:[%s341] sm:$0xff] 0.0
        $region40: #{tpu_custom_call.1} parent=27 // pred_fallthru
          _
        %v357 = vld [vmem:[%s284] sm:$0xff]
        %v358 = vld [vmem:[%s284 + $0x8] sm:$0xff]
        %v359 = vld [vmem:[%s284 + $0x10] sm:$0xff]
        %v360 = vld [vmem:[%s284 + $0x18] sm:$0xff]
        %v361 = vld [vmem:[%s294] sm:$0xff]
        %v362 = vunpack.c.0.s8 %v361
        %v363 = vunpack.c.1.s8 %v361
        %v364 = vunpack.c.2.s8 %v361
        %v365 = vunpack.c.3.s8 %v361
        %v366 = vcvt.s32.f32 %v362
        %v367 = vcvt.s32.f32 %v363
        %v368 = vcvt.s32.f32 %v364
        %v369 = vcvt.s32.f32 %v365
        %v370 = vmax.f32 %v357, 0.0
        %v371 = vmax.f32 %v358, 0.0
        %v372 = vmax.f32 %v359, 0.0
        %v373 = vmax.f32 %v360, 0.0
        %v374 = vmul.f32 %v357, %v366
        %v375 = vmul.f32 %v358, %v367
        %v376 = vmul.f32 %v359, %v368
        %v377 = vmul.f32 %v360, %v369
        %v378 = vsub.f32 %v370, %v374
        %v379 = vsub.f32 %v371, %v375
        %v380 = vsub.f32 %v372, %v376
        %v381 = vsub.f32 %v373, %v377
        %v382 = vand.u32 2147483647, %v357
        %v383 = vand.u32 2147483647, %v358
        %v384 = vand.u32 2147483647, %v359
        %v385 = vand.u32 2147483647, %v360
        %v386 = vsub.f32 0.0, %v382
        %v387 = vsub.f32 0.0, %v383
        %v388 = vsub.f32 0.0, %v384
        %v389 = vsub.f32 0.0, %v385
        %v390 = vmul.f32 %v386, 1.442695
        %v391 = vpow.pop %v390
        %v392 = vmul.f32 %v387, 1.442695
        %v393 = vpow.pop %v392
        %v394 = vmul.f32 %v388, 1.442695
        %v395 = vpow.pop %v394
        %v396 = vmul.f32 %v389, 1.442695
        %v397 = vpow.pop %v396
        %v398 = vadd.f32 %v391, 1.0
        %v399 = vlog2.pop %v398
        %v400 = vmul.f32 %v399, 0.6931472
        %v401 = vmul.f32 -0.5, %v391
        %v402 = vadd.f32 %v401, 1.0
        %v403 = vmul.f32 %v402, %v391
        %v404 = vand.u32 2147483647, %v391
        %vm405 = vcmp.lt.f32.partialorder %v404, 0.0004427343
        %v406 = vsel %vm405, %v403, %v400
        %v407 = vadd.f32 %v393, 1.0
        %v408 = vlog2.pop %v407
        %v409 = vmul.f32 %v408, 0.6931472
        %v410 = vmul.f32 -0.5, %v393
        %v411 = vadd.f32 %v410, 1.0
        %v412 = vmul.f32 %v411, %v393
        %v413 = vand.u32 2147483647, %v393
        %vm414 = vcmp.lt.f32.partialorder %v413, 0.0004427343
        %v415 = vsel %vm414, %v412, %v409
        %v416 = vadd.f32 %v395, 1.0
        %v417 = vlog2.pop %v416
        %v418 = vmul.f32 %v417, 0.6931472
        %v419 = vmul.f32 -0.5, %v395
        %v420 = vadd.f32 %v419, 1.0
        %v421 = vmul.f32 %v420, %v395
        %v422 = vand.u32 2147483647, %v395
        %vm423 = vcmp.lt.f32.partialorder %v422, 0.0004427343
        %v424 = vsel %vm423, %v421, %v418
        %v425 = vadd.f32 %v397, 1.0
        %v426 = vlog2.pop %v425
        %v427 = vmul.f32 %v426, 0.6931472
        %v428 = vmul.f32 -0.5, %v397
        %v429 = vadd.f32 %v428, 1.0
        %v430 = vmul.f32 %v429, %v397
        %v431 = vand.u32 2147483647, %v397
        %vm432 = vcmp.lt.f32.partialorder %v431, 0.0004427343
        %v433 = vsel %vm432, %v430, %v427
        %v434 = vadd.f32 %v378, %v406
        %v435 = vadd.f32 %v379, %v415
        %v436 = vadd.f32 %v380, %v424
        %v437 = vadd.f32 %v381, %v433
        %s438 = sadd.s32 %s36, %s37
        %s439 = smul.u32 %s438, 4096
        %s440 = sadd.s32 %s439, 4096
        %p441 = scmp.le.s32.totalorder %s440, 2048
        // Predicated region
        $region41: #{tpu_custom_call.1} parent=27 // pred_check
          %p442 = pneg %p441
        $region42: #{tpu_custom_call.1} parent=27 // pred_check_branch
          %444 = sbr.rel (%p442) target = $region44
        $region43: #{tpu_custom_call.1} parent=27 // pred_region
          %vm445 = vcmp.eq.s32.totalorder %v362, 1
          %vm446 = vcmp.eq.s32.totalorder %v363, 1
          %vm447 = vcmp.eq.s32.totalorder %v364, 1
          %vm448 = vcmp.eq.s32.totalorder %v365, 1
          %vm449 = vcmp.eq.s32.totalorder %v362, 0
          %vm450 = vcmp.eq.s32.totalorder %v363, 0
          %vm451 = vcmp.eq.s32.totalorder %v364, 0
          %vm452 = vcmp.eq.s32.totalorder %v365, 0
          %v453 = vsel %vm445, %v434, 0.0
          %v454 = vsel %vm446, %v435, 0.0
          %v455 = vsel %vm447, %v436, 0.0
          %v456 = vsel %vm448, %v437, 0.0
          %v457 = vld [vmem:[%s320] sm:$0xff]
          %v458 = vsel %vm445, 1, 0
          %v459 = vsel %vm446, 1, 0
          %v460 = vsel %vm447, 1, 0
          %v461 = vsel %vm448, 1, 0
          %v462 = vcvt.s32.f32 %v458
          %v463 = vcvt.s32.f32 %v459
          %v464 = vcvt.s32.f32 %v460
          %v465 = vcvt.s32.f32 %v461
          %v466 = vadd.f32 %v462, %v463
          %v467 = vadd.f32 %v466, %v464
          %v468 = vadd.f32 %v467, %v465
          %v469 = vadd.f32 %v457, %v468
          %470 = vst [vmem:[%s320] sm:$0xff] %v469
          %v471 = vld [vmem:[%s327] sm:$0xff]
          %v472 = vsel %vm449, 1, 0
          %v473 = vsel %vm450, 1, 0
          %v474 = vsel %vm451, 1, 0
          %v475 = vsel %vm452, 1, 0
          %v476 = vcvt.s32.f32 %v472
          %v477 = vcvt.s32.f32 %v473
          %v478 = vcvt.s32.f32 %v474
          %v479 = vcvt.s32.f32 %v475
          %v480 = vadd.f32 %v476, %v477
          %v481 = vadd.f32 %v480, %v478
          %v482 = vadd.f32 %v481, %v479
          %v483 = vadd.f32 %v471, %v482
          %484 = vst [vmem:[%s327] sm:$0xff] %v483
          %v485 = vld [vmem:[%s334] sm:$0xff]
          %v486 = vadd.f32 %v453, %v454
          %v487 = vadd.f32 %v486, %v455
          %v488 = vadd.f32 %v487, %v456
          %v489 = vadd.f32 %v485, %v488
          %490 = vst [vmem:[%s334] sm:$0xff] %v489
          %v491 = vld [vmem:[%s341] sm:$0xff]
          %v492 = vadd.f32 %v434, %v435
          %v493 = vadd.f32 %v492, %v436
          %v494 = vadd.f32 %v493, %v437
          %v495 = vadd.f32 %v491, %v494
          %496 = vst [vmem:[%s341] sm:$0xff] %v495
        $region44: #{tpu_custom_call.1} parent=27 // pred_fallthru
          _
        %p497 = scmp.gt.s32.totalorder %s440, 2048
        // Predicated region
        $region45: #{tpu_custom_call.1} parent=27 // pred_check
          %p498 = pneg %p497
        $region46: #{tpu_custom_call.1} parent=27 // pred_check_branch
          %500 = sbr.rel (%p498) target = $region48
        $region47: #{tpu_custom_call.1} parent=27 // pred_region
          %v501 = vlaneseq
          %v502 = vshrl.u32 %v501, 7
          %v503 = vadd.s32 %v502, 8
          %v504 = vadd.s32 %v502, 16
          %v505 = vadd.s32 %v502, 24
          %v506 = vlaneseq
          %v507 = vand.u32 %v506, 127
          %v508 = vmul.u32 %v502, 128
          %v509 = vmul.u32 %v503, 128
          %v510 = vmul.u32 %v504, 128
          %v511 = vmul.u32 %v505, 128
          %v512 = vstv %s439
          %v513 = vadd.s32 %v512, %v508
          %v514 = vadd.s32 %v512, %v509
          %v515 = vadd.s32 %v512, %v510
          %v516 = vadd.s32 %v512, %v511
          %v517 = vadd.s32 %v513, %v507
          %v518 = vadd.s32 %v514, %v507
          %v519 = vadd.s32 %v515, %v507
          %v520 = vadd.s32 %v516, %v507
          %vm521 = vcmp.lt.s32.totalorder %v517, 2048
          %vm522 = vcmp.lt.s32.totalorder %v518, 2048
          %vm523 = vcmp.lt.s32.totalorder %v519, 2048
          %vm524 = vcmp.lt.s32.totalorder %v520, 2048
          %vm525 = vcmp.eq.s32.totalorder %v362, 1
          %vm526 = vcmp.eq.s32.totalorder %v363, 1
          %vm527 = vcmp.eq.s32.totalorder %v364, 1
          %vm528 = vcmp.eq.s32.totalorder %v365, 1
          %vm529 = vmand %vm521, %vm525
          %vm530 = vmand %vm522, %vm526
          %vm531 = vmand %vm523, %vm527
          %vm532 = vmand %vm524, %vm528
          %vm533 = vcmp.eq.s32.totalorder %v362, 0
          %vm534 = vcmp.eq.s32.totalorder %v363, 0
          %vm535 = vcmp.eq.s32.totalorder %v364, 0
          %vm536 = vcmp.eq.s32.totalorder %v365, 0
          %vm537 = vmand %vm521, %vm533
          %vm538 = vmand %vm522, %vm534
          %vm539 = vmand %vm523, %vm535
          %vm540 = vmand %vm524, %vm536
          %v541 = vsel %vm521, %v434, 0.0
          %v542 = vsel %vm522, %v435, 0.0
          %v543 = vsel %vm523, %v436, 0.0
          %v544 = vsel %vm524, %v437, 0.0
          %v545 = vsel %vm529, %v434, 0.0
          %v546 = vsel %vm530, %v435, 0.0
          %v547 = vsel %vm531, %v436, 0.0
          %v548 = vsel %vm532, %v437, 0.0
          %v549 = vld [vmem:[%s320] sm:$0xff]
          %v550 = vsel %vm529, 1, 0
          %v551 = vsel %vm530, 1, 0
          %v552 = vsel %vm531, 1, 0
          %v553 = vsel %vm532, 1, 0
          %v554 = vcvt.s32.f32 %v550
          %v555 = vcvt.s32.f32 %v551
          %v556 = vcvt.s32.f32 %v552
          %v557 = vcvt.s32.f32 %v553
          %v558 = vadd.f32 %v554, %v555
          %v559 = vadd.f32 %v558, %v556
          %v560 = vadd.f32 %v559, %v557
          %v561 = vadd.f32 %v549, %v560
          %562 = vst [vmem:[%s320] sm:$0xff] %v561
          %v563 = vld [vmem:[%s327] sm:$0xff]
          %v564 = vsel %vm537, 1, 0
          %v565 = vsel %vm538, 1, 0
          %v566 = vsel %vm539, 1, 0
          %v567 = vsel %vm540, 1, 0
          %v568 = vcvt.s32.f32 %v564
          %v569 = vcvt.s32.f32 %v565
          %v570 = vcvt.s32.f32 %v566
          %v571 = vcvt.s32.f32 %v567
          %v572 = vadd.f32 %v568, %v569
          %v573 = vadd.f32 %v572, %v570
          %v574 = vadd.f32 %v573, %v571
          %v575 = vadd.f32 %v563, %v574
          %576 = vst [vmem:[%s327] sm:$0xff] %v575
          %v577 = vld [vmem:[%s334] sm:$0xff]
          %v578 = vadd.f32 %v545, %v546
          %v579 = vadd.f32 %v578, %v547
          %v580 = vadd.f32 %v579, %v548
          %v581 = vadd.f32 %v577, %v580
          %582 = vst [vmem:[%s334] sm:$0xff] %v581
          %v583 = vld [vmem:[%s341] sm:$0xff]
          %v584 = vadd.f32 %v541, %v542
          %v585 = vadd.f32 %v584, %v543
          %v586 = vadd.f32 %v585, %v544
          %v587 = vadd.f32 %v583, %v586
          %588 = vst [vmem:[%s341] sm:$0xff] %v587
        $region48: #{tpu_custom_call.1} parent=27 // pred_fallthru
          _
        %s589 = sand.u32 %s116, 1
        %s590 = scalar_lea.sflag [#allocation4], %s589
        %s591 = sand.u32 %s116, 1
        %s592 = smul.addr %s591, 8
        %s593 = scalar_lea.vmem [#allocation7], %s592
        %s594 = sand.u32 %s32, 1
        %s595 = scalar_lea.sflag [#allocation9], %s594
        %s596 = sand.u32 %s142, 1
        %s597 = smul.addr %s596, 8
        %s598 = scalar_lea.vmem [#allocation8], %s597
        %s599 = sand.u32 %s32, 1
        %s600 = scalar_lea.sflag [#allocation9], %s599
        %s601 = sand.u32 %s168, 1
        %s602 = smul.addr %s601, 8
        %s603 = scalar_lea.vmem [#allocation10], %s602
        %s604 = sand.u32 %s194, 1
        %s605 = scalar_lea.sflag [#allocation12], %s604
        %s606 = sand.u32 %s194, 1
        %s607 = smul.addr %s606, 8
        %s608 = scalar_lea.vmem [#allocation11], %s607
        // Predicated region
        $region49: #{tpu_custom_call.1} parent=27 // pred_check
          %p609 = pneg %p126
        $region50: #{tpu_custom_call.1} parent=27 // pred_check_branch
          %611 = sbr.rel (%p609) target = $region52
        $region51: #{tpu_custom_call.1} parent=27 // pred_region
          %613 = vsyncadd %s590, 0
          %s614 = smul.addr %s36, 8
          %s615 = scalar_lea.hbm %s2, %s614
          %s617 = sshll.u32 %s593, 4
          %s618 = int_to_ptr.vmem [resolvable:$true] %s617
          %s619 = sshll.u32 %s615, 4
          %s620 = int_to_ptr.hbm [resolvable:$true] %s619
          %622 = dma.vmem_to_hbm [thread:$0]  %s618, 128, %s620, %s590
        $region52: #{tpu_custom_call.1} parent=27 // pred_fallthru
          _
        // Predicated region
        $region53: #{tpu_custom_call.1} parent=27 // pred_check
          %p623 = pneg %p152
        $region54: #{tpu_custom_call.1} parent=27 // pred_check_branch
          %625 = sbr.rel (%p623) target = $region56
        $region55: #{tpu_custom_call.1} parent=27 // pred_region
          %627 = vsyncadd %s595, 0
          %s628 = smul.addr %s36, 8
          %s629 = scalar_lea.hbm %s3, %s628
          %s631 = sshll.u32 %s598, 4
          %s632 = int_to_ptr.vmem [resolvable:$true] %s631
          %s633 = sshll.u32 %s629, 4
          %s634 = int_to_ptr.hbm [resolvable:$true] %s633
          %636 = dma.vmem_to_hbm [thread:$0]  %s632, 128, %s634, %s595
        $region56: #{tpu_custom_call.1} parent=27 // pred_fallthru
          _
        // Predicated region
        $region57: #{tpu_custom_call.1} parent=27 // pred_check
          %p637 = pneg %p178
        $region58: #{tpu_custom_call.1} parent=27 // pred_check_branch
          %639 = sbr.rel (%p637) target = $region60
        $region59: #{tpu_custom_call.1} parent=27 // pred_region
          %641 = vsyncadd %s600, 0
          %s642 = smul.addr %s36, 8
          %s643 = scalar_lea.hbm %s4, %s642
          %s645 = sshll.u32 %s603, 4
          %s646 = int_to_ptr.vmem [resolvable:$true] %s645
          %s647 = sshll.u32 %s643, 4
          %s648 = int_to_ptr.hbm [resolvable:$true] %s647
          %650 = dma.vmem_to_hbm [thread:$0]  %s646, 128, %s648, %s600
        $region60: #{tpu_custom_call.1} parent=27 // pred_fallthru
          _
        // Predicated region
        $region61: #{tpu_custom_call.1} parent=27 // pred_check
          %p651 = pneg %p204
        $region62: #{tpu_custom_call.1} parent=27 // pred_check_branch
          %653 = sbr.rel (%p651) target = $region64
        $region63: #{tpu_custom_call.1} parent=27 // pred_region
          %655 = vsyncadd %s605, 0
          %s656 = smul.addr %s36, 8
          %s657 = scalar_lea.hbm %s5, %s656
          %s659 = sshll.u32 %s608, 4
          %s660 = int_to_ptr.vmem [resolvable:$true] %s659
          %s661 = sshll.u32 %s657, 4
          %s662 = int_to_ptr.hbm [resolvable:$true] %s661
          %664 = dma.vmem_to_hbm [thread:$0]  %s660, 128, %s662, %s605
        $region64: #{tpu_custom_call.1} parent=27 // pred_fallthru
          _
      $region28: #{tpu_custom_call.1} parent=5 // pred_fallthru
        _
      %p665 = scmp.le.s32.totalorder 2, %s27
      // Predicated region
      $region65: #{tpu_custom_call.1} parent=5 // pred_check
        %p666 = pneg %p665
      $region66: #{tpu_custom_call.1} parent=5 // pred_check_branch
        %668 = sbr.rel (%p666) target = $region68
      $region67: #{tpu_custom_call.1} parent=5 // pred_region
        %s669 = ssub.s32 %s27, 2
        // Predicated region
        $region69: #{tpu_custom_call.1} parent=67 // pred_check
          %p670 = pneg %p132
        $region70: #{tpu_custom_call.1} parent=67 // pred_check_branch
          %672 = sbr.rel (%p670) target = $region72
        $region71: #{tpu_custom_call.1} parent=67 // pred_region
          %s673 = sand.u32 %s117, 1
          %s674 = scalar_lea.sflag [#allocation4], %s673
          %s675 = sand.u32 %s117, 1
          %s676 = smul.addr %s675, 8
          %s677 = scalar_lea.vmem [#allocation7], %s676
          %679 = dma.done %s674, 128
        $region72: #{tpu_custom_call.1} parent=67 // pred_fallthru
          _
        // Predicated region
        $region73: #{tpu_custom_call.1} parent=67 // pred_check
          %p680 = pneg %p158
        $region74: #{tpu_custom_call.1} parent=67 // pred_check_branch
          %682 = sbr.rel (%p680) target = $region76
        $region75: #{tpu_custom_call.1} parent=67 // pred_region
          %s683 = sand.u32 %s33, 1
          %s684 = scalar_lea.sflag [#allocation9], %s683
          %s685 = sand.u32 %s143, 1
          %s686 = smul.addr %s685, 8
          %s687 = scalar_lea.vmem [#allocation8], %s686
          %689 = dma.done %s684, 128
        $region76: #{tpu_custom_call.1} parent=67 // pred_fallthru
          _
        // Predicated region
        $region77: #{tpu_custom_call.1} parent=67 // pred_check
          %p690 = pneg %p184
        $region78: #{tpu_custom_call.1} parent=67 // pred_check_branch
          %692 = sbr.rel (%p690) target = $region80
        $region79: #{tpu_custom_call.1} parent=67 // pred_region
          %s693 = sand.u32 %s33, 1
          %s694 = scalar_lea.sflag [#allocation9], %s693
          %s695 = sand.u32 %s169, 1
          %s696 = smul.addr %s695, 8
          %s697 = scalar_lea.vmem [#allocation10], %s696
          %699 = dma.done %s694, 128
        $region80: #{tpu_custom_call.1} parent=67 // pred_fallthru
          _
        // Predicated region
        $region81: #{tpu_custom_call.1} parent=67 // pred_check
          %p700 = pneg %p210
        $region82: #{tpu_custom_call.1} parent=67 // pred_check_branch
          %702 = sbr.rel (%p700) target = $region84
        $region83: #{tpu_custom_call.1} parent=67 // pred_region
          %s703 = sand.u32 %s195, 1
          %s704 = scalar_lea.sflag [#allocation12], %s703
          %s705 = sand.u32 %s195, 1
          %s706 = smul.addr %s705, 8
          %s707 = scalar_lea.vmem [#allocation11], %s706
          %709 = dma.done %s704, 128
        $region84: #{tpu_custom_call.1} parent=67 // pred_fallthru
          _
      $region68: #{tpu_custom_call.1} parent=5 // pred_fallthru
        _
    $region6: #{tpu_custom_call.1} parent=1 // loop_footer
      %s31 = sadd.s32 1, %s27
    $region7: #{tpu_custom_call.1} parent=1 // loop_footer_branch
      %26 = sbr.rel target = $region3
    $region8: #{tpu_custom_call.1} parent=1 // loop_exit
      _
    %710 = vsyncpa [#allocation3], 1
    %s711 = scalar_lea.sflag [#allocation3], 1
    %712 = vsyncpa %s711, 1
    %713 = vsyncpa [#allocation6], 1
    %s714 = scalar_lea.sflag [#allocation6], 1
    %715 = vsyncpa %s714, 1
    %716 = vsyncpa [#allocation4], 1
    %s717 = scalar_lea.sflag [#allocation4], 1
    %718 = vsyncpa %s717, 1
    %719 = vsyncpa [#allocation9], 1
    %s720 = scalar_lea.sflag [#allocation9], 1
    %721 = vsyncpa %s720, 1
    %722 = vsyncpa [#allocation12], 1
    %s723 = scalar_lea.sflag [#allocation12], 1
    %724 = vsyncpa %s723, 1

</llo_original>
